<compile_context>
chip_gen: v7x
topology: tpu7x:2x2x1
jax: 0.10.0
libtpu: 0.0.40
codegen_flags: <defaults>
</compile_context>

<pallas_src>
import functools

import jax
import jax.numpy as jnp
from jax.experimental import pallas as pl
from jax.experimental.pallas import tpu as pltpu


_TM_TARGET = 512  # max rows per M tile (keeps M to one tile for typical B*L)


def _round_up(x, m):
    return (x + m - 1) // m * m


def _largest_tile(total, target, mult=128):
    """Largest multiple of `mult` that divides `total` and is <= target."""
    best = mult
    k = 1
    while k * mult <= min(total, target):
        if total % (k * mult) == 0:
            best = k * mult
        k += 1
    return best


def _tpu_vmem_bytes(default=64 << 20):
    """Physical VMEM capacity; conservative (v7x-safe) default on failure."""
    try:
        info = pltpu.get_tpu_info()
        cap = getattr(info, "vmem_capacity_bytes", None)
        if cap:
            return int(cap)
    except Exception:
        pass
    return default


# --------------------------------------------------------------------------
# Kernels
# --------------------------------------------------------------------------
def _layer1_kernel(x_ref, w1_ref, b1_ref, h_ref):
    # x_ref: (tm, H_pad) bf16   w1_ref: (H_pad, tn1) bf16   b1_ref: (1, tn1) f32
    # h_ref: (tm, tn1) bf16 output (fed to the w2-streaming kernel)
    acc = jnp.dot(x_ref[...], w1_ref[...], preferred_element_type=jnp.float32)
    h_ref[...] = jnp.tanh(acc + b1_ref[...]).astype(h_ref.dtype)


def _layer2_kernel(h_ref, w2_ref, b2_ref, o_ref):
    # h_ref: (tm, Hp_pad) bf16   w2_ref: (Hp_pad, tn) bf16 (one contiguous slab)
    # b2_ref: (1, tn) f32        o_ref: (tm, tn) f32
    y = jnp.dot(h_ref[...], w2_ref[...], preferred_element_type=jnp.float32)
    o_ref[...] = (y + b2_ref[...]).astype(o_ref.dtype)


# --------------------------------------------------------------------------
# Host wrapper
# --------------------------------------------------------------------------
@functools.partial(jax.jit, static_argnames=("tm", "tn1", "tn", "vmem_limit"))
def prefix_mlp(x_pad, w1p, b1p, w2_blocked, b2p, *, tm, tn1, tn, vmem_limit):
    """x_pad: (M_pad, H_pad) bf16 -> (M_pad, Dout_pad) f32 = tanh(x@w1+b1)@w2+b2.

    All weights arrive already padded / bf16 / (for w2) pre-blocked as
    (Dout_pad//tn, Hp_pad, tn) contiguous slabs.
    """
    M_pad, H_pad = x_pad.shape
    Hp_pad = w1p.shape[1]
    n_dout_blocks = w2_blocked.shape[0]
    Dout_pad = n_dout_blocks * tn

    # ---- Layer 1: h = tanh(x @ w1 + b1), tiny (M x Hp) --------------------
    grid1 = (M_pad // tm, Hp_pad // tn1)
    h = pl.pallas_call(
        _layer1_kernel,
        out_shape=jax.ShapeDtypeStruct((M_pad, Hp_pad), jnp.bfloat16),
        grid_spec=pltpu.PrefetchScalarGridSpec(
            num_scalar_prefetch=0,
            grid=grid1,
            in_specs=[
                pl.BlockSpec((tm, H_pad), lambda i, j: (i, 0)),
                pl.BlockSpec((H_pad, tn1), lambda i, j: (0, j)),
                pl.BlockSpec((1, tn1), lambda i, j: (0, j)),
            ],
            out_specs=pl.BlockSpec((tm, tn1), lambda i, j: (i, j)),
        ),
        compiler_params=pltpu.CompilerParams(
            dimension_semantics=("parallel", "parallel"),
            vmem_limit_bytes=vmem_limit,
        ),
    )(x_pad, w1p, b1p)

    # ---- Layer 2: stream w2 (the HBM-dominant tensor) tile-by-tile --------
    # No cross-step state -> both grid axes "parallel" (megacore on v7x).
    # TODO(synk): fp8 (v7x) / int8 (v5e,v6e) storage of w2 with per-column
    # scales would halve the dominant HBM stream if accuracy budget allows.
    grid2 = (M_pad // tm, n_dout_blocks)
    out = pl.pallas_call(
        _layer2_kernel,
        out_shape=jax.ShapeDtypeStruct((M_pad, Dout_pad), jnp.float32),
        grid_spec=pltpu.PrefetchScalarGridSpec(
            num_scalar_prefetch=0,
            grid=grid2,
            in_specs=[
                # h: fixed per i tile (not re-fetched across the j sweep).
                pl.BlockSpec((tm, Hp_pad), lambda i, j: (i, 0)),
                # One fully contiguous (Hp_pad, tn) slab of w2 per grid step.
                pl.BlockSpec((pl.Squeezed(), Hp_pad, tn), lambda i, j: (j, 0, 0)),
                pl.BlockSpec((1, tn), lambda i, j: (0, j)),
            ],
            out_specs=pl.BlockSpec((tm, tn), lambda i, j: (i, j)),
        ),
        compiler_params=pltpu.CompilerParams(
            dimension_semantics=("parallel", "parallel"),
            vmem_limit_bytes=vmem_limit,
        ),
    )(h, w2_blocked, b2p)
    return out


# --------------------------------------------------------------------------
# Module
# --------------------------------------------------------------------------
class PrefixEncoderPallas:
    """JAX/Pallas port of PrefixEncoder (prefix_projection=True)."""

    def __init__(self, pre_seq_len, hidden_size, prefix_hidden_size,
                 num_hidden_layers, prefix_projection=True, key=None,
                 compute_dtype=jnp.bfloat16):
        self.prefix_projection = prefix_projection
        self.hidden_size = hidden_size
        self.out_dim = num_hidden_layers * 2 * hidden_size
        if key is None:
            key = jax.random.PRNGKey(0)

        if not prefix_projection:
            self.embedding = jax.random.normal(
                key, (pre_seq_len, self.out_dim), jnp.float32) * 0.02
            return

        k_emb, k_w1, k_b1, k_w2, k_b2 = jax.random.split(key, 5)
        self.embedding = jax.random.normal(
            k_emb, (pre_seq_len, hidden_size), jnp.float32) * 0.02
        self.w1 = jax.random.normal(
            k_w1, (hidden_size, prefix_hidden_size), jnp.float32) * 0.02
        self.b1 = jax.random.normal(
            k_b1, (1, prefix_hidden_size), jnp.float32) * 0.02
        self.w2 = jax.random.normal(
            k_w2, (prefix_hidden_size, self.out_dim), jnp.float32) * 0.02
        self.b2 = jax.random.normal(
            k_b2, (1, self.out_dim), jnp.float32) * 0.02

        # ---- one-time padded / bf16 / pre-blocked parameter prep ----------
        H, Hp, Dout = hidden_size, prefix_hidden_size, self.out_dim
        H_pad = _round_up(H, 128)
        Hp_pad = _round_up(Hp, 128)
        Dout_pad = _round_up(Dout, 128)

        vmem_cap = _tpu_vmem_bytes()
        if vmem_cap >= (100 << 20):            # v5e / v6e: 128 MiB VMEM
            target_tn, self._vmem_limit = 2048, 96 << 20
        else:                                  # v7x: 64 MiB VMEM
            target_tn, self._vmem_limit = 1024, 56 << 20
        self._tn = _largest_tile(Dout_pad, target_tn)    # divisor of Dout_pad
        self._tn1 = _largest_tile(Hp_pad, 1024)          # divisor of Hp_pad

        # Zero padding is inert: padded H columns hit zero w1 rows, padded Hp
        # columns give tanh(0)=0 and hit zero w2 rows, padded Dout is sliced off.
        self._emb_pad = jnp.pad(
            self.embedding, ((0, 0), (0, H_pad - H))).astype(compute_dtype)
        self._w1p = jnp.pad(
            self.w1, ((0, H_pad - H), (0, Hp_pad - Hp))).astype(compute_dtype)
        self._b1p = jnp.pad(
            self.b1, ((0, 0), (0, Hp_pad - Hp))).astype(jnp.float32)
        w2p = jnp.pad(
            self.w2, ((0, Hp_pad - Hp), (0, Dout_pad - Dout))).astype(compute_dtype)
        n_blocks = Dout_pad // self._tn
        # Pre-block w2 so each grid step DMAs one fully contiguous slab.
        self._w2_blocked = jnp.asarray(
            w2p.reshape(Hp_pad, n_blocks, self._tn).transpose(1, 0, 2))
        self._b2p = jnp.pad(
            self.b2, ((0, 0), (0, Dout_pad - Dout))).astype(jnp.float32)

        self._H_pad, self._Hp_pad = H_pad, Hp_pad
        self._Dout, self._Dout_pad = Dout, Dout_pad

    def __call__(self, prefix):
        # prefix: (B, L) int32 indices into the prefix embedding table.
        B, L = prefix.shape
        if not self.prefix_projection:
            # Pure embedding-lookup path has no matmul; kept as a JAX gather.
            return self.embedding[prefix]

        # TODO(synk): embedding gather kept as plain-JAX glue; fusing it via
        # scalar-prefetch + pl.Element would save one small HBM round-trip.
        x = self._emb_pad[prefix].reshape(B * L, self._H_pad)   # bf16, padded
        M = B * L

        # Minimal row padding: multiple of 16 (bf16 sublanes), near-even tiles
        # of at most _TM_TARGET rows so M stays a single tile in common cases
        # (avoids re-streaming w2 per M tile).
        M_pad16 = _round_up(M, 16)
        n_m = -(-M_pad16 // _TM_TARGET)
        tm = _round_up(-(-M_pad16 // n_m), 16)
        M_pad = tm * n_m
        if M_pad != M:
            x = jnp.pad(x, ((0, M_pad - M), (0, 0)))

        y = prefix_mlp(x, self._w1p, self._b1p, self._w2_blocked, self._b2p,
                       tm=tm, tn1=self._tn1, tn=self._tn,
                       vmem_limit=self._vmem_limit)
        y = y[:M, :self._Dout]                    # no-op view when aligned
        return y.reshape(B, L, self.out_dim)


def _reference(mod, prefix):
    """Pure-JAX reference mimicking the kernel's bf16 weight/activation rounding."""
    x = mod.embedding[prefix]
    xb = x.astype(jnp.bfloat16).astype(jnp.float32)
    w1b = mod.w1.astype(jnp.bfloat16).astype(jnp.float32)
    w2b = mod.w2.astype(jnp.bfloat16).astype(jnp.float32)
    h = jnp.tanh(jnp.dot(xb, w1b) + mod.b1[0])
    hb = h.astype(jnp.bfloat16).astype(jnp.float32)
    return jnp.dot(hb, w2b) + mod.b2[0]


if __name__ == "__main__":
    # Small config consistent with the module's forward.
    batch = 2
    prefix_len = 8          # M = B*L = 16
    pre_seq_len = 8
    hidden_size = 32
    prefix_hidden_size = 64
    num_hidden_layers = 2   # out_dim = 2*2*32 = 128

    key = jax.random.PRNGKey(0)
    k_prefix, k_params = jax.random.split(key)

    module = PrefixEncoderPallas(
        pre_seq_len=pre_seq_len,
        hidden_size=hidden_size,
        prefix_hidden_size=prefix_hidden_size,
        num_hidden_layers=num_hidden_layers,
        prefix_projection=True,
        key=k_params,
    )

    prefix = jax.random.randint(
        k_prefix, (batch, prefix_len), 0, pre_seq_len, dtype=jnp.int32)

    out = module(prefix)
    out = jax.block_until_ready(out)

    expected_shape = (batch, prefix_len, num_hidden_layers * 2 * hidden_size)
    assert out.shape == expected_shape, (out.shape, expected_shape)

    ref = _reference(module, prefix)
    assert jnp.allclose(out, ref, atol=1e-5, rtol=2e-2), (
        "mismatch vs reference:",
        float(jnp.max(jnp.abs(out - ref))),
    )

    print("KERNEL_OK")
</pallas_src>

<mosaic_0001>
module attributes {stable_mosaic.version = 11 : i64} {
  func.func @_layer2_kernel(%arg0: i32, %arg1: i32, %arg2: memref<16x128xbf16, #tpu.memory_space<vmem>>, %arg3: memref<1x128x128xbf16, #tpu.memory_space<vmem>>, %arg4: memref<1x128xf32, #tpu.memory_space<vmem>>, %arg5: memref<16x128xf32, #tpu.memory_space<vmem>>) attributes {dimension_semantics = [#tpu.dimension_semantics<parallel>, #tpu.dimension_semantics<parallel>], iteration_bounds = array<i64: 1, 1>, scalar_prefetch = 0 : i64, scratch_operands = 0 : i64, tpu.core_type = #tpu.core_type<tc>, window_params = [{transform_indices = @transform_0, window_bounds = array<i64: 16, 128>}, {transform_indices = @transform_1, window_bounds = array<i64: 1, 128, 128>}, {transform_indices = @transform_2, window_bounds = array<i64: 1, 128>}, {transform_indices = @transform_3, window_bounds = array<i64: 16, 128>}]} {
    %c0 = arith.constant 0 : index
    %c0_0 = arith.constant 0 : index
    %0 = vector.load %arg2[%c0, %c0_0] : memref<16x128xbf16, #tpu.memory_space<vmem>>, vector<16x128xbf16>
    %c0_1 = arith.constant 0 : index
    %c0_2 = arith.constant 0 : index
    %c0_3 = arith.constant 0 : index
    %1 = vector.load %arg3[%c0_1, %c0_2, %c0_3] : memref<1x128x128xbf16, #tpu.memory_space<vmem>>, vector<1x128x128xbf16>
    %2 = vector.shape_cast %1 : vector<1x128x128xbf16> to vector<128x128xbf16>
    %cst = arith.constant dense<0.000000e+00> : vector<16x128xf32>
    %3 = tpu.matmul %0, %2, %cst {dimension_numbers = #tpu.dot_dimension_numbers<[1], [0], [0], [1], [0, 0, 1, 1], [], []>} : vector<16x128xbf16>, vector<128x128xbf16>, vector<16x128xf32> -> vector<16x128xf32>
    %c0_4 = arith.constant 0 : index
    %c0_5 = arith.constant 0 : index
    %4 = vector.load %arg4[%c0_4, %c0_5] : memref<1x128xf32, #tpu.memory_space<vmem>>, vector<1x128xf32>
    %5 = vector.broadcast %4 : vector<1x128xf32> to vector<16x128xf32>
    %6 = arith.addf %3, %5 : vector<16x128xf32>
    %c0_6 = arith.constant 0 : index
    %c0_7 = arith.constant 0 : index
    %7 = vector.load %arg5[%c0_6, %c0_7] : memref<16x128xf32, #tpu.memory_space<vmem>>, vector<16x128xf32>
    tpu.vector_store %arg5[%c0_6, %c0_7], %6 {strides = array<i32>} : memref<16x128xf32, #tpu.memory_space<vmem>>, vector<16x128xf32>,
    return
  }
  func.func @transform_0(%arg0: i32, %arg1: i32) -> (i32, i32) {
    %c0_i32 = arith.constant 0 : i32
    %c0_i32_0 = arith.constant 0 : i32
    return %arg0, %c0_i32 : i32, i32
  }
  func.func @transform_1(%arg0: i32, %arg1: i32) -> (i32, i32, i32) {
    %c0_i32 = arith.constant 0 : i32
    %c0_i32_0 = arith.constant 0 : i32
    %c0_i32_1 = arith.constant 0 : i32
    return %arg1, %c0_i32, %c0_i32_0 : i32, i32, i32
  }
  func.func @transform_2(%arg0: i32, %arg1: i32) -> (i32, i32) {
    %c0_i32 = arith.constant 0 : i32
    %c0_i32_0 = arith.constant 0 : i32
    return %c0_i32, %arg1 : i32, i32
  }
  func.func @transform_3(%arg0: i32, %arg1: i32) -> (i32, i32) {
    %c0_i32 = arith.constant 0 : i32
    return %arg0, %arg1 : i32, i32
  }
}

module attributes {stable_mosaic.version = 11 : i64} {
  func.func @_layer1_kernel(%arg0: i32, %arg1: i32, %arg2: memref<16x128xbf16, #tpu.memory_space<vmem>>, %arg3: memref<128x128xbf16, #tpu.memory_space<vmem>>, %arg4: memref<1x128xf32, #tpu.memory_space<vmem>>, %arg5: memref<16x128xbf16, #tpu.memory_space<vmem>>) attributes {dimension_semantics = [#tpu.dimension_semantics<parallel>, #tpu.dimension_semantics<parallel>], iteration_bounds = array<i64: 1, 1>, scalar_prefetch = 0 : i64, scratch_operands = 0 : i64, tpu.core_type = #tpu.core_type<tc>, window_params = [{transform_indices = @transform_0, window_bounds = array<i64: 16, 128>}, {transform_indices = @transform_1, window_bounds = array<i64: 128, 128>}, {transform_indices = @transform_2, window_bounds = array<i64: 1, 128>}, {transform_indices = @transform_3, window_bounds = array<i64: 16, 128>}]} {
    %c0 = arith.constant 0 : index
    %c0_0 = arith.constant 0 : index
    %0 = vector.load %arg2[%c0, %c0_0] : memref<16x128xbf16, #tpu.memory_space<vmem>>, vector<16x128xbf16>
    %c0_1 = arith.constant 0 : index
    %c0_2 = arith.constant 0 : index
    %1 = vector.load %arg3[%c0_1, %c0_2] : memref<128x128xbf16, #tpu.memory_space<vmem>>, vector<128x128xbf16>
    %cst = arith.constant dense<0.000000e+00> : vector<16x128xf32>
    %2 = tpu.matmul %0, %1, %cst {dimension_numbers = #tpu.dot_dimension_numbers<[1], [0], [0], [1], [0, 0, 1, 1], [], []>} : vector<16x128xbf16>, vector<128x128xbf16>, vector<16x128xf32> -> vector<16x128xf32>
    %c0_3 = arith.constant 0 : index
    %c0_4 = arith.constant 0 : index
    %3 = vector.load %arg4[%c0_3, %c0_4] : memref<1x128xf32, #tpu.memory_space<vmem>>, vector<1x128xf32>
    %4 = vector.broadcast %3 : vector<1x128xf32> to vector<16x128xf32>
    %5 = arith.addf %2, %4 : vector<16x128xf32>
    %6 = math.tanh %5 : vector<16x128xf32>
    %7 = arith.truncf %6 : vector<16x128xf32> to vector<16x128xbf16>
    %c0_5 = arith.constant 0 : index
    %c0_6 = arith.constant 0 : index
    %8 = vector.load %arg5[%c0_5, %c0_6] : memref<16x128xbf16, #tpu.memory_space<vmem>>, vector<16x128xbf16>
    tpu.vector_store %arg5[%c0_5, %c0_6], %7 {strides = array<i32>} : memref<16x128xbf16, #tpu.memory_space<vmem>>, vector<16x128xbf16>,
    return
  }
  func.func @transform_0(%arg0: i32, %arg1: i32) -> (i32, i32) {
    %c0_i32 = arith.constant 0 : i32
    %c0_i32_0 = arith.constant 0 : i32
    return %arg0, %c0_i32 : i32, i32
  }
  func.func @transform_1(%arg0: i32, %arg1: i32) -> (i32, i32) {
    %c0_i32 = arith.constant 0 : i32
    %c0_i32_0 = arith.constant 0 : i32
    return %c0_i32, %arg1 : i32, i32
  }
  func.func @transform_2(%arg0: i32, %arg1: i32) -> (i32, i32) {
    %c0_i32 = arith.constant 0 : i32
    %c0_i32_0 = arith.constant 0 : i32
    return %c0_i32, %arg1 : i32, i32
  }
  func.func @transform_3(%arg0: i32, %arg1: i32) -> (i32, i32) {
    %c0_i32 = arith.constant 0 : i32
    return %arg0, %arg1 : i32, i32
  }
}

</mosaic_0001>

<llo_original>
// kernel: prefix_mlp.3
$region0: #{prefix_mlp.3}
  #allocation0 [shape = 'u32[]', space=smem, size = 0x4, offset = 0x4, fixed_abs, tag = 'smem constant byte address 0x4 - core index']
  #allocation1 [shape = 'u32[144,128]{1,0:T(1,128)}', space=vmem, size = 0x12000, scoped, tag = 'internal scratch']
  %s0 = inlined_call_operand.vmem [shape: bf16[16,128], index: 0, kind: input, shape index: {}]
  %s1 = inlined_call_operand.vmem [shape: bf16[1,128,128], index: 1, kind: input, shape index: {}]
  %s2 = inlined_call_operand.vmem [shape: f32[1,128], index: 2, kind: input, shape index: {}]
  %s3 = inlined_call_operand.hbm [shape: f32[16,128], index: 3, kind: output, shape index: {}]
  %s4 = sld [smem:[#allocation0]]
  $region22: #{prefix_mlp.3} parent=0
    _
  %s6 = ssub.s32 1, %s4
  %s7 = scalar_select 0, %s6, %s4
  $region1: #{prefix_mlp.3} parent=0
    #allocation2 [shape = 'u8[8192]{0}', space=vmem, size = 0x2000, scoped, tag = 'output window, operand 0, single buffered']
    #allocation3 [shape = 's32[1]{0}', space=sflag, size = 0x4, scoped, tag = 'scoped memory for prefix_mlp.3']
    %8 = vsyncpa [#allocation3], 0
    // Predicated region
    $region2: #{prefix_mlp.3} parent=1 // pred_check
      _
    $region3: #{prefix_mlp.3} parent=1 // pred_check_branch
      %10 = sbr.rel (0) target = $region5
    $region4: #{prefix_mlp.3} parent=1 // pred_region
      _
    $region5: #{prefix_mlp.3} parent=1 // pred_fallthru
      _
    // Predicated region
    $region6: #{prefix_mlp.3} parent=1 // pred_check
      _
    $region7: #{prefix_mlp.3} parent=1 // pred_check_branch
      %12 = sbr.rel (0) target = $region9
    $region8: #{prefix_mlp.3} parent=1 // pred_region
      _
    $region9: #{prefix_mlp.3} parent=1 // pred_fallthru
      _
    // Predicated region
    $region10: #{prefix_mlp.3} parent=1 // pred_check
      _
    $region11: #{prefix_mlp.3} parent=1 // pred_check_branch
      %14 = sbr.rel (0) target = $region13
    $region12: #{prefix_mlp.3} parent=1 // pred_region
      _
    $region13: #{prefix_mlp.3} parent=1 // pred_fallthru
      _
    %v16 = vld [vmem:[%s0] sm:$0xf]
    %v17 = vld [vmem:[%s0 + $0x4] sm:$0xf]
    %v18 = vld [vmem:[%s1] sm:$0xf]
    %v19 = vld [vmem:[%s1 + $0x4] sm:$0xf]
    %v20 = vld [vmem:[%s1 + $0x8] sm:$0xf]
    %v21 = vld [vmem:[%s1 + $0xc] sm:$0xf]
    %v22 = vld [vmem:[%s1 + $0x10] sm:$0xf]
    %v23 = vld [vmem:[%s1 + $0x14] sm:$0xf]
    %v24 = vld [vmem:[%s1 + $0x18] sm:$0xf]
    %v25 = vld [vmem:[%s1 + $0x1c] sm:$0xf]
    %v26 = vld [vmem:[%s1 + $0x20] sm:$0xf]
    %v27 = vld [vmem:[%s1 + $0x24] sm:$0xf]
    %v28 = vld [vmem:[%s1 + $0x28] sm:$0xf]
    %v29 = vld [vmem:[%s1 + $0x2c] sm:$0xf]
    %v30 = vld [vmem:[%s1 + $0x30] sm:$0xf]
    %v31 = vld [vmem:[%s1 + $0x34] sm:$0xf]
    %v32 = vld [vmem:[%s1 + $0x38] sm:$0xf]
    %v33 = vld [vmem:[%s1 + $0x3c] sm:$0xf]
    %v34 = vld [vmem:[%s2] sm:$0x1]
    %v36 = vlaneseq
    %v37 = vshrl.u32 %v36, 7
    %v38 = vsub.s32 0, %v37
    %v39 = vrot.slane %v34, %v38
    %v43 = vunpack.c.l.b16 %v16
    %v44 = vunpack.c.l.b16 %v17
    %v45 = vpack.c.b16 %v44, %v43
    %v63 = vunpack.c.l.b16 %v18
    %v64 = vunpack.c.l.b16 %v19
    %v65 = vunpack.c.l.b16 %v20
    %v66 = vunpack.c.l.b16 %v21
    %v67 = vunpack.c.l.b16 %v22
    %v68 = vunpack.c.l.b16 %v23
    %v69 = vunpack.c.l.b16 %v24
    %v70 = vunpack.c.l.b16 %v25
    %v71 = vunpack.c.l.b16 %v26
    %v72 = vunpack.c.l.b16 %v27
    %v73 = vunpack.c.l.b16 %v28
    %v74 = vunpack.c.l.b16 %v29
    %v75 = vunpack.c.l.b16 %v30
    %v76 = vunpack.c.l.b16 %v31
    %v77 = vunpack.c.l.b16 %v32
    %v78 = vunpack.c.l.b16 %v33
    %v79 = vpack.c.b16 %v64, %v63
    %v80 = vpack.c.b16 %v66, %v65
    %v81 = vpack.c.b16 %v68, %v67
    %v82 = vpack.c.b16 %v70, %v69
    %v83 = vpack.c.b16 %v72, %v71
    %v84 = vpack.c.b16 %v74, %v73
    %v85 = vpack.c.b16 %v76, %v75
    %v86 = vpack.c.b16 %v78, %v77
    %95 = vmatprep.subr.bf16.mxu0 0
    %96 = vmatpush1.bf16.msra.mxu0 %v79
    %97 = vmatprep.subr.bf16.mxu0 0
    %98 = vmatpush1.bf16.msra.mxu0 %v80
    %99 = vmatprep.subr.bf16.mxu0 0
    %100 = vmatpush1.bf16.msra.mxu0 %v81
    %101 = vmatprep.subr.bf16.mxu0 0
    %102 = vmatpush1.bf16.msra.mxu0 %v82
    %103 = vmatprep.subr.bf16.mxu0 0
    %104 = vmatpush1.bf16.msra.mxu0 %v83
    %105 = vmatprep.subr.bf16.mxu0 0
    %106 = vmatpush1.bf16.msra.mxu0 %v84
    %107 = vmatprep.subr.bf16.mxu0 0
    %108 = vmatpush1.bf16.msra.mxu0 %v85
    %109 = vmatprep.subr.bf16.mxu0 0
    %110 = vmatpush1.bf16.msra.mxu0 %v86
    %111 = vmatprep.subr.bf16.mxu0 0
    %112 = vmatpush1.bf16.msra.mxu0 0
    %113 = vmatprep.subr.bf16.mxu0 0
    %114 = vmatpush1.bf16.msra.mxu0 0
    %115 = vmatprep.subr.bf16.mxu0 0
    %116 = vmatpush1.bf16.msra.mxu0 0
    %117 = vmatprep.subr.bf16.mxu0 0
    %118 = vmatpush1.bf16.msra.mxu0 0
    %119 = vmatprep.subr.bf16.mxu0 0
    %120 = vmatpush1.bf16.msra.mxu0 0
    %121 = vmatprep.subr.bf16.mxu0 0
    %122 = vmatpush1.bf16.msra.mxu0 0
    %123 = vmatprep.subr.bf16.mxu0 0
    %124 = vmatpush1.bf16.msra.mxu0 0
    %125 = vmatprep.subr.bf16.mxu0 0
    %126 = vmatpush1.bf16.msra.mxu0 0
    %127 = vmatprep.mubr.bf16.mxu0 0
    %128 = vmatmul.mubr.bf16.gmra.mrb[0].mxu0 %v45
    %v129 = vpop.f32.mrb[0].mxu0
    %v130 = vadd.f32 %v39, %v129
    %v131 = vpop.f32.mrb[0].mxu0
    %v132 = vpop.f32.mrb[0].mxu0
    %v133 = vadd.f32 %v39, %v132
    %v134 = vpop.f32.mrb[0].mxu0
    %135 = vdwg.mxu0
    %136 = vst [vmem:[#allocation2] sm:$0xff] %v130
    %137 = vst [vmem:[#allocation2 + $0x8] sm:$0xff] %v133
    // Predicated region
    $region14: #{prefix_mlp.3} parent=1 // pred_check
      _
    $region15: #{prefix_mlp.3} parent=1 // pred_check_branch
      %139 = sbr.rel (0) target = $region17
    $region16: #{prefix_mlp.3} parent=1 // pred_region
      %s141 = ssub.s32 256, 256
      %142 = vsyncadd [#allocation3], %s141
      %s143 = sshll.u32 [#allocation2], 4
      %s144 = int_to_ptr.vmem [resolvable:$true] %s143
      %149 = dma.vmem_to_hbm [thread:$0]  %s144, 256, %s3, [#allocation3], 128, 128, 8
    $region17: #{prefix_mlp.3} parent=1 // pred_fallthru
      _
    // Predicated region
    $region18: #{prefix_mlp.3} parent=1 // pred_check
      _
    $region19: #{prefix_mlp.3} parent=1 // pred_check_branch
      %151 = sbr.rel (0) target = $region21
    $region20: #{prefix_mlp.3} parent=1 // pred_region
      %152 = dma.done [#allocation3], 256
    $region21: #{prefix_mlp.3} parent=1 // pred_fallthru
      _
    %153 = vsyncpa [#allocation3], 1

// kernel: prefix_mlp.2
$region0: #{prefix_mlp.2}
  #allocation0 [shape = 'u32[]', space=smem, size = 0x4, offset = 0x4, fixed_abs, tag = 'smem constant byte address 0x4 - core index']
  #allocation1 [shape = 'u32[144,128]{1,0:T(1,128)}', space=vmem, size = 0x12000, scoped, tag = 'internal scratch']
  %s0 = inlined_call_operand.hbm [shape: bf16[16,128], index: 0, kind: input, shape index: {}]
  %s1 = inlined_call_operand.hbm [shape: bf16[128,128], index: 1, kind: input, shape index: {}]
  %s2 = inlined_call_operand.hbm [shape: f32[1,128], index: 2, kind: input, shape index: {}]
  %s3 = inlined_call_operand.vmem [shape: bf16[16,128], index: 3, kind: output, shape index: {}]
  %s4 = sld [smem:[#allocation0]]
  $region34: #{prefix_mlp.2} parent=0
    _
  %s6 = ssub.s32 1, %s4
  %s7 = scalar_select 0, %s6, %s4
  $region1: #{prefix_mlp.2} parent=0
    #allocation2 [shape = 'u8[4096]{0}', space=vmem, size = 0x1000, scoped, tag = 'input window, operand 0, single buffered']
    #allocation3 [shape = 's32[1]{0}', space=sflag, size = 0x4, scoped, tag = 'scoped memory for prefix_mlp.2']
    #allocation4 [shape = 'u8[32768]{0}', space=vmem, size = 0x8000, scoped, tag = 'input window, operand 1, single buffered']
    #allocation5 [shape = 's32[1]{0}', space=sflag, size = 0x4, scoped, tag = 'scoped memory for prefix_mlp.2']
    #allocation6 [shape = 'u8[512]{0}', space=vmem, size = 0x400, scoped, tag = 'input window, operand 2, single buffered']
    %8 = vsyncpa [#allocation3], 0
    %9 = vsyncpa [#allocation5], 0
    // Predicated region
    $region2: #{prefix_mlp.2} parent=1 // pred_check
      _
    $region3: #{prefix_mlp.2} parent=1 // pred_check_branch
      %11 = sbr.rel (0) target = $region5
    $region4: #{prefix_mlp.2} parent=1 // pred_region
      %s13 = ssub.s32 128, 128
      %14 = vsyncadd [#allocation3], %s13
      %s15 = sshll.u32 [#allocation2], 4
      %s16 = int_to_ptr.vmem [resolvable:$true] %s15
      %21 = dma.hbm_to_vmem [thread:$0]  %s0, 128, %s16, [#allocation3], 64, 64, 4
    $region5: #{prefix_mlp.2} parent=1 // pred_fallthru
      _
    // Predicated region
    $region6: #{prefix_mlp.2} parent=1 // pred_check
      _
    $region7: #{prefix_mlp.2} parent=1 // pred_check_branch
      %23 = sbr.rel (0) target = $region9
    $region8: #{prefix_mlp.2} parent=1 // pred_region
      %s25 = ssub.s32 1024, 1024
      %26 = vsyncadd [#allocation5], %s25
      %s27 = sshll.u32 [#allocation4], 4
      %s28 = int_to_ptr.vmem [resolvable:$true] %s27
      %33 = dma.hbm_to_vmem [thread:$0]  %s1, 1024, %s28, [#allocation5], 64, 64, 4
    $region9: #{prefix_mlp.2} parent=1 // pred_fallthru
      _
    // Predicated region
    $region10: #{prefix_mlp.2} parent=1 // pred_check
      _
    $region11: #{prefix_mlp.2} parent=1 // pred_check_branch
      %35 = sbr.rel (0) target = $region13
    $region12: #{prefix_mlp.2} parent=1 // pred_region
      %s37 = ssub.s32 16, 16
      %38 = vsyncadd [#allocation5], %s37
      %s40 = sshll.u32 [#allocation6], 4
      %s41 = int_to_ptr.vmem [resolvable:$true] %s40
      %43 = dma.hbm_to_vmem [thread:$0]  %s2, 16, %s41, [#allocation5]
    $region13: #{prefix_mlp.2} parent=1 // pred_fallthru
      _
    // Predicated region
    $region14: #{prefix_mlp.2} parent=1 // pred_check
      _
    $region15: #{prefix_mlp.2} parent=1 // pred_check_branch
      %45 = sbr.rel (0) target = $region17
    $region16: #{prefix_mlp.2} parent=1 // pred_region
      %46 = dma.done [#allocation3], 128
    $region17: #{prefix_mlp.2} parent=1 // pred_fallthru
      _
    // Predicated region
    $region18: #{prefix_mlp.2} parent=1 // pred_check
      _
    $region19: #{prefix_mlp.2} parent=1 // pred_check_branch
      %48 = sbr.rel (0) target = $region21
    $region20: #{prefix_mlp.2} parent=1 // pred_region
      %49 = dma.done [#allocation5], 1024
    $region21: #{prefix_mlp.2} parent=1 // pred_fallthru
      _
    // Predicated region
    $region22: #{prefix_mlp.2} parent=1 // pred_check
      _
    $region23: #{prefix_mlp.2} parent=1 // pred_check_branch
      %51 = sbr.rel (0) target = $region25
    $region24: #{prefix_mlp.2} parent=1 // pred_region
      %52 = dma.done [#allocation5], 16
    $region25: #{prefix_mlp.2} parent=1 // pred_fallthru
      _
    %v54 = vld [vmem:[#allocation2] sm:$0xf]
    %v55 = vld [vmem:[#allocation2 + $0x4] sm:$0xf]
    %v56 = vld [vmem:[#allocation4] sm:$0xf]
    %v57 = vld [vmem:[#allocation4 + $0x4] sm:$0xf]
    %v58 = vld [vmem:[#allocation4 + $0x8] sm:$0xf]
    %v59 = vld [vmem:[#allocation4 + $0xc] sm:$0xf]
    %v60 = vld [vmem:[#allocation4 + $0x10] sm:$0xf]
    %v61 = vld [vmem:[#allocation4 + $0x14] sm:$0xf]
    %v62 = vld [vmem:[#allocation4 + $0x18] sm:$0xf]
    %v63 = vld [vmem:[#allocation4 + $0x1c] sm:$0xf]
    %v64 = vld [vmem:[#allocation4 + $0x20] sm:$0xf]
    %v65 = vld [vmem:[#allocation4 + $0x24] sm:$0xf]
    %v66 = vld [vmem:[#allocation4 + $0x28] sm:$0xf]
    %v67 = vld [vmem:[#allocation4 + $0x2c] sm:$0xf]
    %v68 = vld [vmem:[#allocation4 + $0x30] sm:$0xf]
    %v69 = vld [vmem:[#allocation4 + $0x34] sm:$0xf]
    %v70 = vld [vmem:[#allocation4 + $0x38] sm:$0xf]
    %v71 = vld [vmem:[#allocation4 + $0x3c] sm:$0xf]
    %v72 = vld [vmem:[#allocation6] sm:$0x1]
    %v74 = vlaneseq
    %v75 = vshrl.u32 %v74, 7
    %v76 = vsub.s32 0, %v75
    %v77 = vrot.slane %v72, %v76
    %v81 = vunpack.c.l.b16 %v54
    %v82 = vunpack.c.l.b16 %v55
    %v83 = vpack.c.b16 %v82, %v81
    %v101 = vunpack.c.l.b16 %v56
    %v102 = vunpack.c.l.b16 %v57
    %v103 = vunpack.c.l.b16 %v58
    %v104 = vunpack.c.l.b16 %v59
    %v105 = vunpack.c.l.b16 %v60
    %v106 = vunpack.c.l.b16 %v61
    %v107 = vunpack.c.l.b16 %v62
    %v108 = vunpack.c.l.b16 %v63
    %v109 = vunpack.c.l.b16 %v64
    %v110 = vunpack.c.l.b16 %v65
    %v111 = vunpack.c.l.b16 %v66
    %v112 = vunpack.c.l.b16 %v67
    %v113 = vunpack.c.l.b16 %v68
    %v114 = vunpack.c.l.b16 %v69
    %v115 = vunpack.c.l.b16 %v70
    %v116 = vunpack.c.l.b16 %v71
    %v117 = vpack.c.b16 %v102, %v101
    %v118 = vpack.c.b16 %v104, %v103
    %v119 = vpack.c.b16 %v106, %v105
    %v120 = vpack.c.b16 %v108, %v107
    %v121 = vpack.c.b16 %v110, %v109
    %v122 = vpack.c.b16 %v112, %v111
    %v123 = vpack.c.b16 %v114, %v113
    %v124 = vpack.c.b16 %v116, %v115
    %133 = vmatprep.subr.bf16.mxu0 0
    %134 = vmatpush1.bf16.msra.mxu0 %v117
    %135 = vmatprep.subr.bf16.mxu0 0
    %136 = vmatpush1.bf16.msra.mxu0 %v118
    %137 = vmatprep.subr.bf16.mxu0 0
    %138 = vmatpush1.bf16.msra.mxu0 %v119
    %139 = vmatprep.subr.bf16.mxu0 0
    %140 = vmatpush1.bf16.msra.mxu0 %v120
    %141 = vmatprep.subr.bf16.mxu0 0
    %142 = vmatpush1.bf16.msra.mxu0 %v121
    %143 = vmatprep.subr.bf16.mxu0 0
    %144 = vmatpush1.bf16.msra.mxu0 %v122
    %145 = vmatprep.subr.bf16.mxu0 0
    %146 = vmatpush1.bf16.msra.mxu0 %v123
    %147 = vmatprep.subr.bf16.mxu0 0
    %148 = vmatpush1.bf16.msra.mxu0 %v124
    %149 = vmatprep.subr.bf16.mxu0 0
    %150 = vmatpush1.bf16.msra.mxu0 0
    %151 = vmatprep.subr.bf16.mxu0 0
    %152 = vmatpush1.bf16.msra.mxu0 0
    %153 = vmatprep.subr.bf16.mxu0 0
    %154 = vmatpush1.bf16.msra.mxu0 0
    %155 = vmatprep.subr.bf16.mxu0 0
    %156 = vmatpush1.bf16.msra.mxu0 0
    %157 = vmatprep.subr.bf16.mxu0 0
    %158 = vmatpush1.bf16.msra.mxu0 0
    %159 = vmatprep.subr.bf16.mxu0 0
    %160 = vmatpush1.bf16.msra.mxu0 0
    %161 = vmatprep.subr.bf16.mxu0 0
    %162 = vmatpush1.bf16.msra.mxu0 0
    %163 = vmatprep.subr.bf16.mxu0 0
    %164 = vmatpush1.bf16.msra.mxu0 0
    %165 = vmatprep.mubr.bf16.mxu0 0
    %166 = vmatmul.mubr.bf16.gmra.mrb[0].mxu0 %v83
    %v167 = vpop.f32.mrb[0].mxu0
    %v168 = vadd.f32 %v77, %v167
    %v169 = vpop.f32.mrb[0].mxu0
    %v170 = vpop.f32.mrb[0].mxu0
    %v171 = vadd.f32 %v77, %v170
    %v172 = vpop.f32.mrb[0].mxu0
    %173 = vdwg.mxu0
    %v174 = vtanh.pop %v168
    %v175 = vtanh.pop %v171
    %v176 = vpack.c.bf16 %v175, %v174
    %v178 = vunpack.c.l.b16 %v176
    %v179 = vunpack.c.h.b16 %v176
    %v180 = vpack.c.b16 %v178, %v178
    %v181 = vpack.c.b16 %v179, %v179
    %184 = vst [vmem:[%s3] sm:$0xf] %v180
    %185 = vst [vmem:[%s3 + $0x4] sm:$0xf] %v181
    // Predicated region
    $region26: #{prefix_mlp.2} parent=1 // pred_check
      _
    $region27: #{prefix_mlp.2} parent=1 // pred_check_branch
      %187 = sbr.rel (0) target = $region29
    $region28: #{prefix_mlp.2} parent=1 // pred_region
      _
    $region29: #{prefix_mlp.2} parent=1 // pred_fallthru
      _
    // Predicated region
    $region30: #{prefix_mlp.2} parent=1 // pred_check
      _
    $region31: #{prefix_mlp.2} parent=1 // pred_check_branch
      %189 = sbr.rel (0) target = $region33
    $region32: #{prefix_mlp.2} parent=1 // pred_region
      _
    $region33: #{prefix_mlp.2} parent=1 // pred_fallthru
      _
    %190 = vsyncpa [#allocation3], 1
    %191 = vsyncpa [#allocation5], 1

</llo_original>
